<compile_context>
chip_gen: v6e
topology: v6e:2x2x1
jax: 0.10.0
libtpu: 0.0.40
codegen_flags: <defaults>
</compile_context>

<pallas_src>
import jax
import jax.numpy as jnp
from jax.experimental import pallas as pl
from jax.experimental.pallas import tpu as pltpu

# ----------------------------- config (small) -------------------------------
GAT_DIM1 = 32                      # aasist_config['gat_dims'][1]
AASIST_FEAT_DIM = 5 * GAT_DIM1     # 160
SER_FEAT_DIM = 256
COMB_DIM = AASIST_FEAT_DIM + SER_FEAT_DIM   # 416
NUM_CLASSES = 2
LANE_PAD = 128                     # MXU-friendly padded N for the projection
EPS = 1e-12                        # F.normalize default eps
_EPS2 = EPS * EPS


def _round_up(x, m):
    return ((x + m - 1) // m) * m


# ------------------------------ Pallas kernel -------------------------------
def _head_kernel(a_ref, s_ref, wa_ref, ws_ref, bias_ref, comb_ref, out_ref):
    """Fused: normalize(a), normalize(s), combined-normalize, split linear."""
    a = a_ref[...].astype(jnp.float32)               # (TB, 160)
    s = s_ref[...].astype(jnp.float32)               # (TB, 256)

    # Per-row sum of squares -- the only two cross-lane reduces in the kernel.
    ssa = jnp.sum(a * a, axis=1, keepdims=True)      # (TB, 1)
    sss = jnp.sum(s * s, axis=1, keepdims=True)      # (TB, 1)

    # F.normalize: x / max(||x||, eps) == x * rsqrt(max(sumsq, eps^2)) (sumsq>=0)
    inv_a = jax.lax.rsqrt(jnp.maximum(ssa, _EPS2))
    inv_s = jax.lax.rsqrt(jnp.maximum(sss, _EPS2))

    # ||a_norm||^2 + ||s_norm||^2 computed analytically -> no 416-lane reduce.
    na2 = ssa * inv_a * inv_a
    ns2 = sss * inv_s * inv_s
    inv_c = jax.lax.rsqrt(jnp.maximum(na2 + ns2, _EPS2))

    a_sc = a * (inv_a * inv_c)                       # a-half of combined_feat
    s_sc = s * (inv_s * inv_c)                       # s-half of combined_feat

    # Combined-feature writeback: two direct sliced stores, no concat temp.
    comb_ref[:, :AASIST_FEAT_DIM] = a_sc
    comb_ref[:, AASIST_FEAT_DIM:COMB_DIM] = s_sc

    # Split projection against the 128-lane-padded weight halves: the matmul
    # never consumes the (lane-shifted) concatenated data.
    logits = (jnp.dot(a_sc, wa_ref[...], preferred_element_type=jnp.float32)
              + jnp.dot(s_sc, ws_ref[...], preferred_element_type=jnp.float32))

    # True (TB, 2) output block: last dim equals the full array dim -> legal.
    out_ref[...] = logits[:, :NUM_CLASSES] + bias_ref[...]


# --------------------------- parameter preparation --------------------------
def prepare_head_params(weight, bias):
    """weight: (COMB_DIM, 2) f32 (nn.Linear weight transposed); bias: (2,).
       Done ONCE at setup time (not per forward call)."""
    w_pad = jnp.zeros((COMB_DIM, LANE_PAD), jnp.float32)
    w_pad = w_pad.at[:, :NUM_CLASSES].set(weight.astype(jnp.float32))
    wa = w_pad[:AASIST_FEAT_DIM]                     # (160, 128)
    ws = w_pad[AASIST_FEAT_DIM:]                     # (256, 128)
    bias_row = bias.astype(jnp.float32).reshape(1, NUM_CLASSES)
    return wa, ws, bias_row


# --------------------------------- wrapper -----------------------------------
def aasist_concat_head(aasist_feat, ser_feat, wa, ws, bias_row, *, block_b=1024):
    """aasist_feat: (B, 160); ser_feat: (B, 256) (any float dtype);
       wa/ws/bias_row from prepare_head_params.
       Returns (combined_feat (B, 416) f32, out (B, 2) f32)."""
    B = aasist_feat.shape[0]

    # Batch tiling: whole batch if tiny; otherwise >=2 multiple-of-8 tiles so
    # both v7x TensorCores get work, capped at block_b for VMEM.
    if B <= 8:
        tb = B
    elif B <= 2 * block_b:
        tb = min(block_b, _round_up(pl.cdiv(B, 2), 8))
    else:
        tb = block_b
    grid = (pl.cdiv(B, tb),)

    comb, out = pl.pallas_call(
        _head_kernel,
        out_shape=(
            jax.ShapeDtypeStruct((B, COMB_DIM), jnp.float32),
            jax.ShapeDtypeStruct((B, NUM_CLASSES), jnp.float32),
        ),
        grid=grid,
        in_specs=[
            pl.BlockSpec((tb, AASIST_FEAT_DIM), lambda i: (i, 0)),
            pl.BlockSpec((tb, SER_FEAT_DIM), lambda i: (i, 0)),
            pl.BlockSpec((AASIST_FEAT_DIM, LANE_PAD), lambda i: (0, 0)),
            pl.BlockSpec((SER_FEAT_DIM, LANE_PAD), lambda i: (0, 0)),
            pl.BlockSpec((1, NUM_CLASSES), lambda i: (0, 0)),
        ],
        out_specs=(
            pl.BlockSpec((tb, COMB_DIM), lambda i: (i, 0)),
            pl.BlockSpec((tb, NUM_CLASSES), lambda i: (i, 0)),
        ),
        compiler_params=pltpu.CompilerParams(
            dimension_semantics=("parallel",),
            vmem_limit_bytes=32 << 20,
        ),
    )(aasist_feat, ser_feat, wa, ws, bias_row)

    return comb, out


# -------------------- stand-in backbones (plain JAX glue) -------------------
def standin_aasist(x, w_a):
    # x: (B, L) raw waveform -> (B, AASIST_FEAT_DIM)
    return jnp.tanh(x @ w_a)


def standin_ser(x_emo, w_s):
    # Reference forward: x_emo = x_emo.permute(0, 2, 1, 3) before acrnn.
    x_emo = jnp.transpose(x_emo, (0, 2, 1, 3))       # (B, C, T, F)
    B = x_emo.shape[0]
    flat = x_emo.reshape(B, -1)
    return jnp.tanh(flat @ w_s)                      # (B, SER_FEAT_DIM)


def model_forward(x, x_emo, params):
    aasist_feat = standin_aasist(x, params["w_a"])
    ser_feat = standin_ser(x_emo, params["w_s"])
    # Native-dtype ingest; per-tile upcast happens inside the kernel.
    return aasist_concat_head(
        aasist_feat, ser_feat,
        params["wa"], params["ws"], params["bias_row"],
    )


# ------------------------------ reference (JAX) ------------------------------
def _ref_head(a, s, w, b):
    def l2n(v):
        return v / jnp.maximum(
            jnp.sqrt(jnp.sum(v * v, axis=1, keepdims=True)), EPS)
    c = l2n(jnp.concatenate([l2n(a), l2n(s)], axis=1))
    return c, c @ w + b


if __name__ == "__main__":
    key = jax.random.PRNGKey(0)
    k1, k2, k3, k4, k5, k6 = jax.random.split(key, 6)

    B = 2
    L = 1024                     # small stand-in waveform length
    T, C, F_ = 16, 3, 8          # small stand-in emo spectrogram (B, T, C, F)

    x = jax.random.normal(k1, (B, L), dtype=jnp.float32)
    x_emo = jax.random.normal(k2, (B, T, C, F_), dtype=jnp.float32)

    lin_w = 0.1 * jax.random.normal(k5, (COMB_DIM, NUM_CLASSES), jnp.float32)
    lin_b = 0.1 * jax.random.normal(k6, (NUM_CLASSES,), jnp.float32)
    wa, ws, bias_row = prepare_head_params(lin_w, lin_b)   # once, at setup

    params = {
        "w_a": 0.05 * jax.random.normal(k3, (L, AASIST_FEAT_DIM), jnp.float32),
        "w_s": 0.05 * jax.random.normal(k4, (T * C * F_, SER_FEAT_DIM),
                                        jnp.float32),
        "wa": wa, "ws": ws, "bias_row": bias_row,
    }

    combined_feat, out = model_forward(x, x_emo, params)
    jax.block_until_ready((combined_feat, out))

    # correctness check against pure-JAX reference of the head
    a_ref = standin_aasist(x, params["w_a"])
    s_ref = standin_ser(x_emo, params["w_s"])
    c_ref, o_ref = _ref_head(a_ref, s_ref, lin_w, lin_b)
    assert combined_feat.shape == (B, COMB_DIM)
    assert out.shape == (B, NUM_CLASSES)
    assert jnp.allclose(combined_feat, c_ref, atol=1e-5, rtol=1e-5)
    assert jnp.allclose(out, o_ref, atol=1e-5, rtol=1e-5)

    print("KERNEL_OK")
</pallas_src>

<mosaic_0001>
module attributes {stable_mosaic.version = 11 : i64} {
  func.func @_head_kernel(%arg0: i32, %arg1: memref<2x160xf32, #tpu.memory_space<vmem>>, %arg2: memref<2x256xf32, #tpu.memory_space<vmem>>, %arg3: memref<160x128xf32, #tpu.memory_space<vmem>>, %arg4: memref<256x128xf32, #tpu.memory_space<vmem>>, %arg5: memref<1x2xf32, #tpu.memory_space<vmem>>, %arg6: memref<2x416xf32, #tpu.memory_space<vmem>>, %arg7: memref<2x2xf32, #tpu.memory_space<vmem>>) attributes {dimension_semantics = [#tpu.dimension_semantics<parallel>], iteration_bounds = array<i64: 1>, scalar_prefetch = 0 : i64, scratch_operands = 0 : i64, tpu.core_type = #tpu.core_type<tc>, window_params = [{transform_indices = @transform_0, window_bounds = array<i64: 2, 160>}, {transform_indices = @transform_1, window_bounds = array<i64: 2, 256>}, {pipeline_mode = #tpu.pipeline_mode<synchronous>, transform_indices = @transform_2, window_bounds = array<i64: 160, 128>}, {pipeline_mode = #tpu.pipeline_mode<synchronous>, transform_indices = @transform_3, window_bounds = array<i64: 256, 128>}, {pipeline_mode = #tpu.pipeline_mode<synchronous>, transform_indices = @transform_4, window_bounds = array<i64: 1, 2>}, {transform_indices = @transform_5, window_bounds = array<i64: 2, 416>}, {transform_indices = @transform_6, window_bounds = array<i64: 2, 2>}]} {
    %c0 = arith.constant 0 : index
    %c0_0 = arith.constant 0 : index
    %0 = vector.load %arg1[%c0, %c0_0] : memref<2x160xf32, #tpu.memory_space<vmem>>, vector<2x160xf32>
    %c0_1 = arith.constant 0 : index
    %c0_2 = arith.constant 0 : index
    %1 = vector.load %arg2[%c0_1, %c0_2] : memref<2x256xf32, #tpu.memory_space<vmem>>, vector<2x256xf32>
    %2 = arith.mulf %0, %0 : vector<2x160xf32>
    %cst = arith.constant dense<0.000000e+00> : vector<2xf32>
    %3 = vector.multi_reduction <add>, %2, %cst [1] : vector<2x160xf32> to vector<2xf32>
    %4 = vector.shape_cast %3 : vector<2xf32> to vector<2x1xf32>
    %5 = arith.mulf %1, %1 : vector<2x256xf32>
    %cst_3 = arith.constant dense<0.000000e+00> : vector<2xf32>
    %6 = vector.multi_reduction <add>, %5, %cst_3 [1] : vector<2x256xf32> to vector<2xf32>
    %7 = vector.shape_cast %6 : vector<2xf32> to vector<2x1xf32>
    %cst_4 = arith.constant 1.000000e-24 : f32
    %8 = vector.broadcast %cst_4 : f32 to vector<2x1xf32>
    %9 = arith.maximumf %4, %8 : vector<2x1xf32>
    %10 = math.rsqrt %9 : vector<2x1xf32>
    %cst_5 = arith.constant 1.000000e-24 : f32
    %11 = vector.broadcast %cst_5 : f32 to vector<2x1xf32>
    %12 = arith.maximumf %7, %11 : vector<2x1xf32>
    %13 = math.rsqrt %12 : vector<2x1xf32>
    %14 = arith.mulf %4, %10 : vector<2x1xf32>
    %15 = arith.mulf %14, %10 : vector<2x1xf32>
    %16 = arith.mulf %7, %13 : vector<2x1xf32>
    %17 = arith.mulf %16, %13 : vector<2x1xf32>
    %18 = arith.addf %15, %17 : vector<2x1xf32>
    %cst_6 = arith.constant 1.000000e-24 : f32
    %19 = vector.broadcast %cst_6 : f32 to vector<2x1xf32>
    %20 = arith.maximumf %18, %19 : vector<2x1xf32>
    %21 = math.rsqrt %20 : vector<2x1xf32>
    %22 = arith.mulf %10, %21 : vector<2x1xf32>
    %23 = vector.broadcast %22 : vector<2x1xf32> to vector<2x160xf32>
    %24 = arith.mulf %0, %23 : vector<2x160xf32>
    %25 = arith.mulf %13, %21 : vector<2x1xf32>
    %26 = vector.broadcast %25 : vector<2x1xf32> to vector<2x256xf32>
    %27 = arith.mulf %1, %26 : vector<2x256xf32>
    %c0_7 = arith.constant 0 : index
    %c0_8 = arith.constant 0 : index
    %28 = vector.load %arg6[%c0_7, %c0_8] : memref<2x416xf32, #tpu.memory_space<vmem>>, vector<2x160xf32>
    tpu.vector_store %arg6[%c0_7, %c0_8], %24 {strides = array<i32>} : memref<2x416xf32, #tpu.memory_space<vmem>>, vector<2x160xf32>,
    %c0_9 = arith.constant 0 : index
    %c160 = arith.constant 160 : index
    %29 = vector.load %arg6[%c0_9, %c160] : memref<2x416xf32, #tpu.memory_space<vmem>>, vector<2x256xf32>
    tpu.vector_store %arg6[%c0_9, %c160], %27 {strides = array<i32>} : memref<2x416xf32, #tpu.memory_space<vmem>>, vector<2x256xf32>,
    %c0_10 = arith.constant 0 : index
    %c0_11 = arith.constant 0 : index
    %30 = vector.load %arg3[%c0_10, %c0_11] : memref<160x128xf32, #tpu.memory_space<vmem>>, vector<160x128xf32>
    %cst_12 = arith.constant dense<0.000000e+00> : vector<2x128xf32>
    %31 = tpu.matmul %24, %30, %cst_12 {dimension_numbers = #tpu.dot_dimension_numbers<[1], [0], [0], [1], [0, 0, 1, 1], [], []>} : vector<2x160xf32>, vector<160x128xf32>, vector<2x128xf32> -> vector<2x128xf32>
    %c0_13 = arith.constant 0 : index
    %c0_14 = arith.constant 0 : index
    %32 = vector.load %arg4[%c0_13, %c0_14] : memref<256x128xf32, #tpu.memory_space<vmem>>, vector<256x128xf32>
    %cst_15 = arith.constant dense<0.000000e+00> : vector<2x128xf32>
    %33 = tpu.matmul %27, %32, %cst_15 {dimension_numbers = #tpu.dot_dimension_numbers<[1], [0], [0], [1], [0, 0, 1, 1], [], []>} : vector<2x256xf32>, vector<256x128xf32>, vector<2x128xf32> -> vector<2x128xf32>
    %34 = arith.addf %31, %33 : vector<2x128xf32>
    %35 = vector.extract_strided_slice %34 {offsets = [0, 0], sizes = [2, 2], strides = [1, 1]} : vector<2x128xf32> to vector<2x2xf32>
    %c0_16 = arith.constant 0 : index
    %c0_17 = arith.constant 0 : index
    %36 = vector.load %arg5[%c0_16, %c0_17] : memref<1x2xf32, #tpu.memory_space<vmem>>, vector<1x2xf32>
    %37 = vector.broadcast %36 : vector<1x2xf32> to vector<2x2xf32>
    %38 = arith.addf %35, %37 : vector<2x2xf32>
    %c0_18 = arith.constant 0 : index
    %c0_19 = arith.constant 0 : index
    %39 = vector.load %arg7[%c0_18, %c0_19] : memref<2x2xf32, #tpu.memory_space<vmem>>, vector<2x2xf32>
    tpu.vector_store %arg7[%c0_18, %c0_19], %38 {strides = array<i32>} : memref<2x2xf32, #tpu.memory_space<vmem>>, vector<2x2xf32>,
    return
  }
  func.func @transform_0(%arg0: i32) -> (i32, i32) {
    %c0_i32 = arith.constant 0 : i32
    %c0_i32_0 = arith.constant 0 : i32
    return %arg0, %c0_i32 : i32, i32
  }
  func.func @transform_1(%arg0: i32) -> (i32, i32) {
    %c0_i32 = arith.constant 0 : i32
    %c0_i32_0 = arith.constant 0 : i32
    return %arg0, %c0_i32 : i32, i32
  }
  func.func @transform_2(%arg0: i32) -> (i32, i32) {
    %c0_i32 = arith.constant 0 : i32
    %c0_i32_0 = arith.constant 0 : i32
    %c0_i32_1 = arith.constant 0 : i32
    return %c0_i32, %c0_i32_0 : i32, i32
  }
  func.func @transform_3(%arg0: i32) -> (i32, i32) {
    %c0_i32 = arith.constant 0 : i32
    %c0_i32_0 = arith.constant 0 : i32
    %c0_i32_1 = arith.constant 0 : i32
    return %c0_i32, %c0_i32_0 : i32, i32
  }
  func.func @transform_4(%arg0: i32) -> (i32, i32) {
    %c0_i32 = arith.constant 0 : i32
    %c0_i32_0 = arith.constant 0 : i32
    %c0_i32_1 = arith.constant 0 : i32
    return %c0_i32, %c0_i32_0 : i32, i32
  }
  func.func @transform_5(%arg0: i32) -> (i32, i32) {
    %c0_i32 = arith.constant 0 : i32
    %c0_i32_0 = arith.constant 0 : i32
    return %arg0, %c0_i32 : i32, i32
  }
  func.func @transform_6(%arg0: i32) -> (i32, i32) {
    %c0_i32 = arith.constant 0 : i32
    %c0_i32_0 = arith.constant 0 : i32
    return %arg0, %c0_i32 : i32, i32
  }
}

</mosaic_0001>

<llo_original>
// kernel: tpu_custom_call.1
$region0: #{tpu_custom_call.1}
  #allocation0 [shape = 'u32[]', space=smem, size = 0x4, offset = 0x4, fixed_abs, tag = 'smem constant byte address 0x4 - core index']
  #allocation1 [shape = 'u32[144,128]{1,0:T(1,128)}', space=vmem, size = 0x12000, scoped, tag = 'internal scratch']
  %s0 = inlined_call_operand.hbm [shape: f32[2,160], index: 0, kind: input, shape index: {}]
  %s1 = inlined_call_operand.hbm [shape: f32[2,256], index: 1, kind: input, shape index: {}]
  %s2 = inlined_call_operand.hbm [shape: f32[160,128], index: 2, kind: input, shape index: {}]
  %s3 = inlined_call_operand.hbm [shape: f32[256,128], index: 3, kind: input, shape index: {}]
  %s4 = inlined_call_operand.vmem [shape: f32[1,2], index: 4, kind: input, shape index: {}]
  %s5 = inlined_call_operand.hbm [shape: f32[2,416], index: 5, kind: output, shape index: {0}]
  %s6 = inlined_call_operand.hbm [shape: f32[2,2], index: 6, kind: output, shape index: {1}]
  %7 = xla_tuple %s5, %s6
  %s8 = sld [smem:[#allocation0]]
  $region54: #{tpu_custom_call.1} parent=0
    _
  %s10 = ssub.s32 1, %s8
  %s11 = scalar_select 0, %s10, %s8
  $region1: #{tpu_custom_call.1} parent=0
    #allocation2 [shape = 'u8[2048]{0}', space=vmem, size = 0x800, scoped, tag = 'input window, operand 0, single buffered']
    #allocation3 [shape = 's32[1]{0}', space=sflag, size = 0x4, scoped, tag = 'scoped memory for tpu_custom_call.1']
    #allocation4 [shape = 's32[1]{0}', space=sflag, size = 0x4, scoped, tag = 'scoped memory for tpu_custom_call.1']
    #allocation5 [shape = 'u8[2048]{0}', space=vmem, size = 0x800, scoped, tag = 'input window, operand 1, single buffered']
    #allocation6 [shape = 's32[1]{0}', space=sflag, size = 0x4, scoped, tag = 'scoped memory for tpu_custom_call.1']
    #allocation7 [shape = 'u8[81920]{0}', space=vmem, size = 0x14000, scoped, tag = 'input window, operand 2, single buffered']
    #allocation8 [shape = 'u8[131072]{0}', space=vmem, size = 0x20000, scoped, tag = 'input window, operand 3, single buffered']
    #allocation9 [shape = 's32[1]{0}', space=sflag, size = 0x4, scoped, tag = 'scoped memory for tpu_custom_call.1']
    #allocation10 [shape = 'u8[4096]{0}', space=vmem, size = 0x1000, scoped, tag = 'output window, operand 0, single buffered']
    #allocation11 [shape = 'u8[1024]{0}', space=vmem, size = 0x400, scoped, tag = 'output window, operand 1, single buffered']
    #allocation12 [shape = 's32[1]{0}', space=sflag, size = 0x4, scoped, tag = 'scoped memory for tpu_custom_call.1']
    %12 = vsyncpa [#allocation3], 0
    %13 = vsyncpa [#allocation6], 0
    %14 = vsyncpa [#allocation9], 0
    %15 = vsyncpa [#allocation4], 0
    %16 = vsyncpa [#allocation12], 0
    // Predicated region
    $region2: #{tpu_custom_call.1} parent=1 // pred_check
      _
    $region3: #{tpu_custom_call.1} parent=1 // pred_check_branch
      %18 = sbr.rel (0) target = $region5
    $region4: #{tpu_custom_call.1} parent=1 // pred_region
      %s20 = ssub.s32 64, 64
      %21 = vsyncadd [#allocation3], %s20
      %s23 = sshll.u32 [#allocation2], 4
      %s24 = int_to_ptr.vmem [resolvable:$true] %s23
      %26 = dma.hbm_to_vmem [thread:$0]  %s0, 64, %s24, [#allocation3]
    $region5: #{tpu_custom_call.1} parent=1 // pred_fallthru
      _
    // Predicated region
    $region6: #{tpu_custom_call.1} parent=1 // pred_check
      _
    $region7: #{tpu_custom_call.1} parent=1 // pred_check_branch
      %28 = sbr.rel (0) target = $region9
    $region8: #{tpu_custom_call.1} parent=1 // pred_region
      %s30 = ssub.s32 64, 64
      %31 = vsyncadd [#allocation6], %s30
      %s33 = sshll.u32 [#allocation5], 4
      %s34 = int_to_ptr.vmem [resolvable:$true] %s33
      %36 = dma.hbm_to_vmem [thread:$0]  %s1, 64, %s34, [#allocation6]
    $region9: #{tpu_custom_call.1} parent=1 // pred_fallthru
      _
    // Predicated region
    $region10: #{tpu_custom_call.1} parent=1 // pred_check
      _
    $region11: #{tpu_custom_call.1} parent=1 // pred_check_branch
      %38 = sbr.rel (0) target = $region13
    $region12: #{tpu_custom_call.1} parent=1 // pred_region
      %s40 = ssub.s32 2560, 2560
      %41 = vsyncadd [#allocation6], %s40
      %s42 = sshll.u32 [#allocation7], 4
      %s43 = int_to_ptr.vmem [resolvable:$true] %s42
      %48 = dma.hbm_to_vmem [thread:$0]  %s2, 2560, %s43, [#allocation6], 128, 128, 8
    $region13: #{tpu_custom_call.1} parent=1 // pred_fallthru
      _
    // Predicated region
    $region14: #{tpu_custom_call.1} parent=1 // pred_check
      _
    $region15: #{tpu_custom_call.1} parent=1 // pred_check_branch
      %50 = sbr.rel (0) target = $region17
    $region16: #{tpu_custom_call.1} parent=1 // pred_region
      %s52 = ssub.s32 4096, 4096
      %53 = vsyncadd [#allocation9], %s52
      %s54 = sshll.u32 [#allocation8], 4
      %s55 = int_to_ptr.vmem [resolvable:$true] %s54
      %60 = dma.hbm_to_vmem [thread:$0]  %s3, 4096, %s55, [#allocation9], 128, 128, 8
    $region17: #{tpu_custom_call.1} parent=1 // pred_fallthru
      _
    // Predicated region
    $region18: #{tpu_custom_call.1} parent=1 // pred_check
      _
    $region19: #{tpu_custom_call.1} parent=1 // pred_check_branch
      %62 = sbr.rel (0) target = $region21
    $region20: #{tpu_custom_call.1} parent=1 // pred_region
      _
    $region21: #{tpu_custom_call.1} parent=1 // pred_fallthru
      _
    // Predicated region
    $region22: #{tpu_custom_call.1} parent=1 // pred_check
      _
    $region23: #{tpu_custom_call.1} parent=1 // pred_check_branch
      %64 = sbr.rel (0) target = $region25
    $region24: #{tpu_custom_call.1} parent=1 // pred_region
      %65 = dma.done [#allocation3], 64
    $region25: #{tpu_custom_call.1} parent=1 // pred_fallthru
      _
    // Predicated region
    $region26: #{tpu_custom_call.1} parent=1 // pred_check
      _
    $region27: #{tpu_custom_call.1} parent=1 // pred_check_branch
      %67 = sbr.rel (0) target = $region29
    $region28: #{tpu_custom_call.1} parent=1 // pred_region
      %68 = dma.done [#allocation6], 64
    $region29: #{tpu_custom_call.1} parent=1 // pred_fallthru
      _
    // Predicated region
    $region30: #{tpu_custom_call.1} parent=1 // pred_check
      _
    $region31: #{tpu_custom_call.1} parent=1 // pred_check_branch
      %70 = sbr.rel (0) target = $region33
    $region32: #{tpu_custom_call.1} parent=1 // pred_region
      %71 = dma.done [#allocation6], 2560
    $region33: #{tpu_custom_call.1} parent=1 // pred_fallthru
      _
    // Predicated region
    $region34: #{tpu_custom_call.1} parent=1 // pred_check
      _
    $region35: #{tpu_custom_call.1} parent=1 // pred_check_branch
      %73 = sbr.rel (0) target = $region37
    $region36: #{tpu_custom_call.1} parent=1 // pred_region
      %74 = dma.done [#allocation9], 4096
    $region37: #{tpu_custom_call.1} parent=1 // pred_fallthru
      _
    %v75 = vld [vmem:[#allocation2] sm:$0xf]
    %v76 = vld [vmem:[#allocation5] sm:$0xf]
    %v77 = vmul.f32 %v75, %v75
    %v80 = vunpack.c.l.s4 1983009808
    %v81 = vunpack.c.0.s8 %v80
    %v82 = vlaneseq
    %v83 = vshrl.u32 %v82, 7
    %v84 = vsub.s32 %v81, %v83
    %v85 = vrot.slane %v77, %v84
    %v86 = vcombine.high %v85, %v85
    %vm89 = vcmask 1041408
    %v90 = vsel %vm89, %v85, 0.0
    %vm91 = vcmask 254976
    %v92 = vsel %vm91, %v86, 0.0
    %v93 = vadd.f32 %v90, %v92
    %94 = vadd.xlane.f32.xlu0 %v93
    %v95 = vpop.xlane.xlu0 %94
    %v96 = vmul.f32 %v76, %v76
    %v99 = vunpack.c.l.s4 1983009808
    %v100 = vunpack.c.0.s8 %v99
    %v101 = vlaneseq
    %v102 = vshrl.u32 %v101, 7
    %v103 = vsub.s32 %v100, %v102
    %v104 = vrot.slane %v96, %v103
    %v105 = vcombine.high %v104, %v104
    %v108 = vsel %vm89, %v104, 0.0
    %v109 = vsel %vm89, %v105, 0.0
    %v110 = vadd.f32 %v108, %v109
    %111 = vadd.xlane.f32.xlu0 %v110
    %v112 = vpop.xlane.xlu0 %111
    %v113 = vmax.f32 %v95, 1e-24
    %v114 = vrsqrt.pop %v113
    %v115 = vmax.f32 %v112, 1e-24
    %v116 = vrsqrt.pop %v115
    %v117 = vmul.f32 %v95, %v114
    %v118 = vmul.f32 %v117, %v114
    %v119 = vmul.f32 %v112, %v116
    %v120 = vmul.f32 %v119, %v116
    %v121 = vadd.f32 %v118, %v120
    %v122 = vmax.f32 %v121, 1e-24
    %v123 = vrsqrt.pop %v122
    %v124 = vmul.f32 %v114, %v123
    %v127 = vunpack.c.l.s4 269488144
    %v128 = vunpack.c.0.s8 %v127
    %v129 = vlaneseq
    %v130 = vshrl.u32 %v129, 7
    %v131 = vsub.s32 %v128, %v130
    %v132 = vrot.slane %v124, %v131
    %v134 = vmul.f32 %v75, %v132
    %v135 = vmul.f32 %v116, %v123
    %v138 = vunpack.c.l.s4 269488144
    %v139 = vunpack.c.0.s8 %v138
    %v140 = vlaneseq
    %v141 = vshrl.u32 %v140, 7
    %v142 = vsub.s32 %v139, %v141
    %v143 = vrot.slane %v135, %v142
    %v145 = vmul.f32 %v76, %v143
    %vm146 = vcmask 257026
    %vm147 = vmor %vm146, %vm89
    %148 = vst.msk [vmem:[#allocation10] sm:$0xf] %vm147, %v134
    %150 = vrot.lane.b32.xlu0 %v145, 32
    %v151 = vpop.permute.xlu0 %150
    %v152 = vrot.slane %v151, 6
    %vm153 = vcmask 261120
    %v154 = vsel %vm153, %v152, %v151
    %vm156 = vcmask 1041664
    %vm157 = vcmask 1043458
    %vm158 = vmor %vm157, %vm156
    %vm159 = vcmask 259076
    %vm160 = vmor %vm159, %vm158
    %161 = vst.msk [vmem:[#allocation10 + $0x2] sm:$0x3f] %vm160, %v154
    %v162 = vld [vmem:[#allocation7] sm:$0xff]
    %v163 = vld [vmem:[#allocation7 + $0x8] sm:$0xff]
    %v164 = vld [vmem:[#allocation7 + $0x10] sm:$0xff]
    %v165 = vld [vmem:[#allocation7 + $0x18] sm:$0xff]
    %v166 = vld [vmem:[#allocation7 + $0x20] sm:$0xff]
    %v167 = vld [vmem:[#allocation7 + $0x28] sm:$0xff]
    %v168 = vld [vmem:[#allocation7 + $0x30] sm:$0xff]
    %v169 = vld [vmem:[#allocation7 + $0x38] sm:$0xff]
    %v170 = vld [vmem:[#allocation7 + $0x40] sm:$0xff]
    %v171 = vld [vmem:[#allocation7 + $0x48] sm:$0xff]
    %v172 = vld [vmem:[#allocation7 + $0x50] sm:$0xff]
    %v173 = vld [vmem:[#allocation7 + $0x58] sm:$0xff]
    %v174 = vld [vmem:[#allocation7 + $0x60] sm:$0xff]
    %v175 = vld [vmem:[#allocation7 + $0x68] sm:$0xff]
    %v176 = vld [vmem:[#allocation7 + $0x70] sm:$0xff]
    %v177 = vld [vmem:[#allocation7 + $0x78] sm:$0xff]
    %v178 = vld [vmem:[#allocation7 + $0x80] sm:$0xff]
    %v179 = vld [vmem:[#allocation7 + $0x88] sm:$0xff]
    %v180 = vld [vmem:[#allocation7 + $0x90] sm:$0xff]
    %v181 = vld [vmem:[#allocation7 + $0x98] sm:$0xff]
    %v182 = vld [vmem:[#allocation8] sm:$0xff]
    %v183 = vld [vmem:[#allocation8 + $0x8] sm:$0xff]
    %v184 = vld [vmem:[#allocation8 + $0x10] sm:$0xff]
    %v185 = vld [vmem:[#allocation8 + $0x18] sm:$0xff]
    %v186 = vld [vmem:[#allocation8 + $0x20] sm:$0xff]
    %v187 = vld [vmem:[#allocation8 + $0x28] sm:$0xff]
    %v188 = vld [vmem:[#allocation8 + $0x30] sm:$0xff]
    %v189 = vld [vmem:[#allocation8 + $0x38] sm:$0xff]
    %v190 = vld [vmem:[#allocation8 + $0x40] sm:$0xff]
    %v191 = vld [vmem:[#allocation8 + $0x48] sm:$0xff]
    %v192 = vld [vmem:[#allocation8 + $0x50] sm:$0xff]
    %v193 = vld [vmem:[#allocation8 + $0x58] sm:$0xff]
    %v194 = vld [vmem:[#allocation8 + $0x60] sm:$0xff]
    %v195 = vld [vmem:[#allocation8 + $0x68] sm:$0xff]
    %v196 = vld [vmem:[#allocation8 + $0x70] sm:$0xff]
    %v197 = vld [vmem:[#allocation8 + $0x78] sm:$0xff]
    %v198 = vld [vmem:[#allocation8 + $0x80] sm:$0xff]
    %v199 = vld [vmem:[#allocation8 + $0x88] sm:$0xff]
    %v200 = vld [vmem:[#allocation8 + $0x90] sm:$0xff]
    %v201 = vld [vmem:[#allocation8 + $0x98] sm:$0xff]
    %v202 = vld [vmem:[#allocation8 + $0xa0] sm:$0xff]
    %v203 = vld [vmem:[#allocation8 + $0xa8] sm:$0xff]
    %v204 = vld [vmem:[#allocation8 + $0xb0] sm:$0xff]
    %v205 = vld [vmem:[#allocation8 + $0xb8] sm:$0xff]
    %v206 = vld [vmem:[#allocation8 + $0xc0] sm:$0xff]
    %v207 = vld [vmem:[#allocation8 + $0xc8] sm:$0xff]
    %v208 = vld [vmem:[#allocation8 + $0xd0] sm:$0xff]
    %v209 = vld [vmem:[#allocation8 + $0xd8] sm:$0xff]
    %v210 = vld [vmem:[#allocation8 + $0xe0] sm:$0xff]
    %v211 = vld [vmem:[#allocation8 + $0xe8] sm:$0xff]
    %v212 = vld [vmem:[#allocation8 + $0xf0] sm:$0xff]
    %v213 = vld [vmem:[#allocation8 + $0xf8] sm:$0xff]
    %v215 = vunpack.c.l.s4 1983009808
    %v216 = vunpack.c.0.s8 %v215
    %v217 = vlaneseq
    %v218 = vshrl.u32 %v217, 7
    %v219 = vsub.s32 %v216, %v218
    %v220 = vrot.slane %v145, %v219
    %v221 = vcombine.high %v220, %v220
    %224 = vmatprep.subr.mxu0 0.0
    %225 = vmatpush1.msra.mxu0 %v197
    %226 = vmatprep.subr.mxu0 0.0
    %227 = vmatpush1.msra.mxu0 %v196
    %228 = vmatprep.subr.mxu0 0.0
    %229 = vmatpush1.msra.mxu0 %v195
    %230 = vmatprep.subr.mxu0 0.0
    %231 = vmatpush1.msra.mxu0 %v194
    %232 = vmatprep.subr.mxu0 0.0
    %233 = vmatpush1.msra.mxu0 %v193
    %234 = vmatprep.subr.mxu0 0.0
    %235 = vmatpush1.msra.mxu0 %v192
    %236 = vmatprep.subr.mxu0 0.0
    %237 = vmatpush1.msra.mxu0 %v191
    %238 = vmatprep.subr.mxu0 0.0
    %239 = vmatpush1.msra.mxu0 %v190
    %240 = vmatprep.subr.mxu0 0.0
    %241 = vmatpush1.msra.mxu0 %v189
    %242 = vmatprep.subr.mxu0 0.0
    %243 = vmatpush1.msra.mxu0 %v188
    %244 = vmatprep.subr.mxu0 0.0
    %245 = vmatpush1.msra.mxu0 %v187
    %246 = vmatprep.subr.mxu0 0.0
    %247 = vmatpush1.msra.mxu0 %v186
    %248 = vmatprep.subr.mxu0 0.0
    %249 = vmatpush1.msra.mxu0 %v185
    %250 = vmatprep.subr.mxu0 0.0
    %251 = vmatpush1.msra.mxu0 %v184
    %252 = vmatprep.subr.mxu0 0.0
    %253 = vmatpush1.msra.mxu0 %v183
    %254 = vmatprep.subr.mxu0 0.0
    %255 = vmatpush1.msra.mxu0 %v182
    %256 = vmatprep.subr.mxu0 0.0
    %257 = vmatpush2.msra.mxu0 %v213
    %258 = vmatprep.subr.mxu0 0.0
    %259 = vmatpush2.msra.mxu0 %v212
    %260 = vmatprep.subr.mxu0 0.0
    %261 = vmatpush2.msra.mxu0 %v211
    %262 = vmatprep.subr.mxu0 0.0
    %263 = vmatpush2.msra.mxu0 %v210
    %264 = vmatprep.subr.mxu0 0.0
    %265 = vmatpush2.msra.mxu0 %v209
    %266 = vmatprep.subr.mxu0 0.0
    %267 = vmatpush2.msra.mxu0 %v208
    %268 = vmatprep.subr.mxu0 0.0
    %269 = vmatpush2.msra.mxu0 %v207
    %270 = vmatprep.subr.mxu0 0.0
    %271 = vmatpush2.msra.mxu0 %v206
    %272 = vmatprep.subr.mxu0 0.0
    %273 = vmatpush2.msra.mxu0 %v205
    %274 = vmatprep.subr.mxu0 0.0
    %275 = vmatpush2.msra.mxu0 %v204
    %276 = vmatprep.subr.mxu0 0.0
    %277 = vmatpush2.msra.mxu0 %v203
    %278 = vmatprep.subr.mxu0 0.0
    %279 = vmatpush2.msra.mxu0 %v202
    %280 = vmatprep.subr.mxu0 0.0
    %281 = vmatpush2.msra.mxu0 %v201
    %282 = vmatprep.subr.mxu0 0.0
    %283 = vmatpush2.msra.mxu0 %v200
    %284 = vmatprep.subr.mxu0 0.0
    %285 = vmatpush2.msra.mxu0 %v199
    %286 = vmatprep.subr.mxu0 0.0
    %287 = vmatpush2.msra.mxu0 %v198
    %288 = vmatprep.mubr.f32.mxu0 %v221
    %289 = vmatmul.mubr.f32.gmra.mxu0 %v220
    %v290 = vpop.f32.mrf.mxu0
    %v291 = vadd.f32 0.0, %v290
    %v292 = vpop.f32.mrf.mxu0
    %293 = vdwg.mxu0
    %v296 = vunpack.c.l.s4 1983009808
    %v297 = vunpack.c.0.s8 %v296
    %v298 = vlaneseq
    %v299 = vshrl.u32 %v298, 7
    %v300 = vsub.s32 %v297, %v299
    %v301 = vrot.slane %v134, %v300
    %v302 = vcombine.high %v301, %v301
    %v304 = vsel %vm153, %v302, 0
    %306 = vmatprep.subr.mxu0 0.0
    %307 = vmatpush1.msra.mxu0 %v177
    %308 = vmatprep.subr.mxu0 0.0
    %309 = vmatpush1.msra.mxu0 %v176
    %310 = vmatprep.subr.mxu0 0.0
    %311 = vmatpush1.msra.mxu0 %v175
    %312 = vmatprep.subr.mxu0 0.0
    %313 = vmatpush1.msra.mxu0 %v174
    %314 = vmatprep.subr.mxu0 0.0
    %315 = vmatpush1.msra.mxu0 %v173
    %316 = vmatprep.subr.mxu0 0.0
    %317 = vmatpush1.msra.mxu0 %v172
    %318 = vmatprep.subr.mxu0 0.0
    %319 = vmatpush1.msra.mxu0 %v171
    %320 = vmatprep.subr.mxu0 0.0
    %321 = vmatpush1.msra.mxu0 %v170
    %322 = vmatprep.subr.mxu0 0.0
    %323 = vmatpush1.msra.mxu0 %v169
    %324 = vmatprep.subr.mxu0 0.0
    %325 = vmatpush1.msra.mxu0 %v168
    %326 = vmatprep.subr.mxu0 0.0
    %327 = vmatpush1.msra.mxu0 %v167
    %328 = vmatprep.subr.mxu0 0.0
    %329 = vmatpush1.msra.mxu0 %v166
    %330 = vmatprep.subr.mxu0 0.0
    %331 = vmatpush1.msra.mxu0 %v165
    %332 = vmatprep.subr.mxu0 0.0
    %333 = vmatpush1.msra.mxu0 %v164
    %334 = vmatprep.subr.mxu0 0.0
    %335 = vmatpush1.msra.mxu0 %v163
    %336 = vmatprep.subr.mxu0 0.0
    %337 = vmatpush1.msra.mxu0 %v162
    %338 = vmatprep.subr.mxu0 0.0
    %339 = vmatpush2.msra.mxu0 0.0
    %340 = vmatprep.subr.mxu0 0.0
    %341 = vmatpush2.msra.mxu0 0.0
    %342 = vmatprep.subr.mxu0 0.0
    %343 = vmatpush2.msra.mxu0 0.0
    %344 = vmatprep.subr.mxu0 0.0
    %345 = vmatpush2.msra.mxu0 0.0
    %346 = vmatprep.subr.mxu0 0.0
    %347 = vmatpush2.msra.mxu0 0.0
    %348 = vmatprep.subr.mxu0 0.0
    %349 = vmatpush2.msra.mxu0 0.0
    %350 = vmatprep.subr.mxu0 0.0
    %351 = vmatpush2.msra.mxu0 0.0
    %352 = vmatprep.subr.mxu0 0.0
    %353 = vmatpush2.msra.mxu0 0.0
    %354 = vmatprep.subr.mxu0 0.0
    %355 = vmatpush2.msra.mxu0 0.0
    %356 = vmatprep.subr.mxu0 0.0
    %357 = vmatpush2.msra.mxu0 0.0
    %358 = vmatprep.subr.mxu0 0.0
    %359 = vmatpush2.msra.mxu0 0.0
    %360 = vmatprep.subr.mxu0 0.0
    %361 = vmatpush2.msra.mxu0 0.0
    %362 = vmatprep.subr.mxu0 0.0
    %363 = vmatpush2.msra.mxu0 %v181
    %364 = vmatprep.subr.mxu0 0.0
    %365 = vmatpush2.msra.mxu0 %v180
    %366 = vmatprep.subr.mxu0 0.0
    %367 = vmatpush2.msra.mxu0 %v179
    %368 = vmatprep.subr.mxu0 0.0
    %369 = vmatpush2.msra.mxu0 %v178
    %370 = vmatprep.mubr.f32.mxu0 %v304
    %371 = vmatmul.mubr.f32.gmra.mxu0 %v301
    %v372 = vpop.f32.mrf.mxu0
    %v373 = vadd.f32 %v291, %v372
    %v374 = vpop.f32.mrf.mxu0
    %375 = vdwg.mxu0
    %v376 = vld [vmem:[%s4] sm:$0x1]
    %v378 = vlaneseq
    %v379 = vshrl.u32 %v378, 7
    %v380 = vsub.s32 0, %v379
    %v381 = vrot.slane %v376, %v380
    %v383 = vadd.f32 %v373, %v381
    %vm384 = vcmask 9216
    %385 = vst.msk [vmem:[#allocation11] sm:$0x3] %vm384, %v383
    // Predicated region
    $region38: #{tpu_custom_call.1} parent=1 // pred_check
      _
    $region39: #{tpu_custom_call.1} parent=1 // pred_check_branch
      %387 = sbr.rel (0) target = $region41
    $region40: #{tpu_custom_call.1} parent=1 // pred_region
      %s389 = ssub.s32 128, 128
      %390 = vsyncadd [#allocation4], %s389
      %s392 = sshll.u32 [#allocation10], 4
      %s393 = int_to_ptr.vmem [resolvable:$true] %s392
      %395 = dma.vmem_to_hbm [thread:$0]  %s393, 128, %s5, [#allocation4]
    $region41: #{tpu_custom_call.1} parent=1 // pred_fallthru
      _
    // Predicated region
    $region42: #{tpu_custom_call.1} parent=1 // pred_check
      _
    $region43: #{tpu_custom_call.1} parent=1 // pred_check_branch
      %397 = sbr.rel (0) target = $region45
    $region44: #{tpu_custom_call.1} parent=1 // pred_region
      %s399 = ssub.s32 32, 32
      %400 = vsyncadd [#allocation12], %s399
      %s402 = sshll.u32 [#allocation11], 4
      %s403 = int_to_ptr.vmem [resolvable:$true] %s402
      %405 = dma.vmem_to_hbm [thread:$0]  %s403, 32, %s6, [#allocation12]
    $region45: #{tpu_custom_call.1} parent=1 // pred_fallthru
      _
    // Predicated region
    $region46: #{tpu_custom_call.1} parent=1 // pred_check
      _
    $region47: #{tpu_custom_call.1} parent=1 // pred_check_branch
      %407 = sbr.rel (0) target = $region49
    $region48: #{tpu_custom_call.1} parent=1 // pred_region
      %408 = dma.done [#allocation4], 128
    $region49: #{tpu_custom_call.1} parent=1 // pred_fallthru
      _
    // Predicated region
    $region50: #{tpu_custom_call.1} parent=1 // pred_check
      _
    $region51: #{tpu_custom_call.1} parent=1 // pred_check_branch
      %410 = sbr.rel (0) target = $region53
    $region52: #{tpu_custom_call.1} parent=1 // pred_region
      %411 = dma.done [#allocation12], 32
    $region53: #{tpu_custom_call.1} parent=1 // pred_fallthru
      _
    %412 = vsyncpa [#allocation3], 1
    %413 = vsyncpa [#allocation6], 1
    %414 = vsyncpa [#allocation9], 1
    %415 = vsyncpa [#allocation4], 1
    %416 = vsyncpa [#allocation12], 1

</llo_original>
